<compile_context>
chip_gen: v6e
topology: v6e:2x2x1
jax: 0.10.0
libtpu: 0.0.40
codegen_flags: <defaults>
</compile_context>

<pallas_src>
import functools

import jax
import jax.numpy as jnp
from jax import lax
from jax.experimental import pallas as pl
from jax.experimental.pallas import tpu as pltpu


def _special_loss_kernel(ib_ref, jb_ref, xi_ref, xj_ref, invi_ref, invj_ref,
                         out_ref, acc_ref, *, valid_b):
    t = pl.program_id(0)
    k = pl.program_id(1)
    nk = pl.num_programs(1)
    ib = ib_ref[t]
    jb = jb_ref[t]

    # ---- per-(i,j) tile init -------------------------------------------------
    @pl.when(k == 0)
    def _init_acc():
        acc_ref[...] = jnp.zeros_like(acc_ref)

    # Per-row output accumulator is resident across the j sweep (consecutive
    # triangle steps with the same ib) and across k; init on the first visit,
    # which is the (ib == jb, k == 0) step of the i-major triangle order.
    @pl.when(jnp.logical_and(ib == jb, k == 0))
    def _init_out():
        out_ref[...] = jnp.zeros_like(out_ref)

    # ---- Gram block: A @ B.T directly on the MXU (contract dim 1 of both) ----
    acc_ref[...] += lax.dot_general(
        xi_ref[...], xj_ref[...], (((1,), (1,)), ((), ())),
        preferred_element_type=jnp.float32)

    # ---- epilogue: normalize, clip, -log(1 - s), mask, row-reduce ------------
    @pl.when(k == nk - 1)
    def _epilogue():
        inv_i = invi_ref[...]          # (BT, 1) fp32
        inv_j = invj_ref[0]            # (1, BT) fp32
        sim = acc_ref[...] * inv_i * inv_j
        sim = jnp.clip(sim, 0.0005, 0.9995)
        loss = -jnp.log(1.0 - sim)     # (BT, BT) fp32

        m, n = loss.shape
        r = lax.broadcasted_iota(jnp.int32, (m, n), 0) + ib * m   # global row
        c = lax.broadcasted_iota(jnp.int32, (m, n), 1) + jb * n   # global col
        valid = jnp.logical_and(
            jnp.logical_and(r < valid_b, c < valid_b), r != c)
        loss = jnp.where(valid, loss, 0.0)

        # Off-diagonal blocks stand in for their mirrored (jb, ib) twin.
        w = jnp.where(ib == jb, 1.0, 2.0)
        out_ref[...] += w * jnp.sum(loss, axis=1, keepdims=True)


def _round_up(v, m):
    return ((v + m - 1) // m) * m


def _cdiv(a, b):
    return -(-a // b)


def special_special_loss(embedded_a, *, block_b=None, block_k=None,
                         compute_dtype=None):
    """Pallas TPU implementation of SpecialSpecialLoss.forward.

    embedded_a: (B, D) fp32 or bf16 embeddings. Returns scalar float32 loss.
    Note: B == 1 yields NaN (mean over an empty set), matching the PyTorch module.
    """
    x = embedded_a if compute_dtype is None else embedded_a.astype(compute_dtype)
    B, D = x.shape
    itemsize = jnp.dtype(x.dtype).itemsize
    min_sub = {1: 32, 2: 16}.get(itemsize, 8)        # min sublane tile per dtype

    # ---- row-tile size: 256-multiple (512) for big B, single padded tile else -
    if block_b is not None:
        BT = block_b
    elif B > 512:
        BT = 512
    else:
        BT = _round_up(max(B, min_sub), min_sub)
    Bp = _round_up(B, BT)
    nb = Bp // BT

    # ---- feature-chunk size: as large as the streamed-operand budget allows ---
    if block_k is not None:
        TK = block_k
        nk = _cdiv(D, TK)
    else:
        budget = 20 * 1024 * 1024                     # 2 inputs x 2 buffers + acc
        cap = max((budget - BT * BT * 4) // (4 * BT * itemsize), 128)
        cap = max((cap // 128) * 128, 128)
        nk = max(_cdiv(D, cap), 1)
        TK = _round_up(_cdiv(D, nk), 128)
    Dp = nk * TK

    # ---- O(B*D) pre-pass: inverse norms with F.normalize semantics ------------
    x32 = x.astype(jnp.float32)
    ssq = jnp.sum(x32 * x32, axis=1, keepdims=True)
    inv = jnp.minimum(lax.rsqrt(ssq), 1e12)           # == 1 / max(||x||, 1e-12)

    # ---- zero-pad to tile multiples (padded rows/cols are masked in-kernel) ---
    xp = jnp.pad(x, ((0, Bp - B), (0, Dp - D)))
    inv_col = jnp.pad(inv, ((0, Bp - B), (0, 0)))     # (Bp, 1)
    inv_row = inv_col.reshape(nb, 1, BT)              # lane-legal col-side view

    # ---- linearized j >= i block-pair schedule (scalar prefetch) --------------
    ib_list, jb_list = [], []
    for i in range(nb):
        for j in range(i, nb):
            ib_list.append(i)
            jb_list.append(j)
    ib_arr = jnp.asarray(ib_list, dtype=jnp.int32)
    jb_arr = jnp.asarray(jb_list, dtype=jnp.int32)
    num_tri = len(ib_list)

    partial_rows = pl.pallas_call(
        functools.partial(_special_loss_kernel, valid_b=B),
        out_shape=jax.ShapeDtypeStruct((Bp, 1), jnp.float32),
        grid_spec=pltpu.PrefetchScalarGridSpec(
            num_scalar_prefetch=2,
            grid=(num_tri, nk),
            in_specs=[
                pl.BlockSpec((BT, TK), lambda t, k, ib, jb: (ib[t], k)),       # row side
                pl.BlockSpec((BT, TK), lambda t, k, ib, jb: (jb[t], k)),       # col side
                pl.BlockSpec((BT, 1), lambda t, k, ib, jb: (ib[t], 0)),        # 1/||x_i||
                pl.BlockSpec((1, 1, BT), lambda t, k, ib, jb: (jb[t], 0, 0)),  # 1/||x_j||
            ],
            out_specs=pl.BlockSpec((BT, 1), lambda t, k, ib, jb: (ib[t], 0)),
            scratch_shapes=[pltpu.VMEM((BT, BT), jnp.float32)],                # Gram acc
        ),
        compiler_params=pltpu.CompilerParams(
            # Output blocks are revisited across the triangle axis -> "arbitrary".
            dimension_semantics=("arbitrary", "arbitrary"),
            vmem_limit_bytes=32 * 1024 * 1024),
    )(ib_arr, jb_arr, xp, xp, inv_col, inv_row)

    total = jnp.sum(partial_rows)
    return total / jnp.float32(B * (B - 1))


def _reference(embedded_a):
    """Pure-JAX replica of the PyTorch module (normalize -> matmul -> clamp)."""
    x = embedded_a.astype(jnp.float32)
    n = jnp.sqrt(jnp.sum(x * x, axis=1, keepdims=True))
    xn = x / jnp.maximum(n, 1e-12)
    sim = jnp.clip(xn @ xn.T, 0.0005, 0.9995)
    bs = x.shape[0]
    mask = ~jnp.eye(bs, dtype=bool)
    vals = -jnp.log(1.0 - sim)
    return jnp.sum(jnp.where(mask, vals, 0.0)) / (bs * (bs - 1))


if __name__ == "__main__":
    key = jax.random.PRNGKey(0)
    B, D = 32, 256
    embedded_a = jax.random.normal(key, (B, D), dtype=jnp.float32)
    ref = _reference(embedded_a)

    # Default path: single row tile (BT = 32), TK = D, grid (1, 1).
    loss_default = special_special_loss(embedded_a)
    jax.block_until_ready(loss_default)
    assert jnp.allclose(loss_default, ref, rtol=1e-4, atol=1e-5), (loss_default, ref)

    # Multi-tile path: grid (3, 2) exercises the symmetric triangle schedule,
    # K accumulation, off-diagonal doubling and diagonal-block masking.
    loss_tiled = special_special_loss(embedded_a, block_b=16, block_k=128)
    jax.block_until_ready(loss_tiled)
    assert jnp.allclose(loss_tiled, ref, rtol=1e-4, atol=1e-5), (loss_tiled, ref)

    # Non-divisible shapes exercise row/feature zero-padding + epilogue masks.
    B2, D2 = 30, 200
    x2 = jax.random.normal(jax.random.PRNGKey(1), (B2, D2), dtype=jnp.float32)
    ref2 = _reference(x2)
    loss_pad_default = special_special_loss(x2)
    loss_pad_tiled = special_special_loss(x2, block_b=16, block_k=128)
    jax.block_until_ready((loss_pad_default, loss_pad_tiled))
    assert jnp.allclose(loss_pad_default, ref2, rtol=1e-4, atol=1e-5), (loss_pad_default, ref2)
    assert jnp.allclose(loss_pad_tiled, ref2, rtol=1e-4, atol=1e-5), (loss_pad_tiled, ref2)

    print("KERNEL_OK")
</pallas_src>

<mosaic_0001>
module attributes {stable_mosaic.version = 11 : i64} {
  func.func @_special_loss_kernel(%arg0: i32, %arg1: i32, %arg2: memref<1xi32, #tpu.memory_space<smem>>, %arg3: memref<1xi32, #tpu.memory_space<smem>>, %arg4: memref<32x256xf32, #tpu.memory_space<vmem>>, %arg5: memref<32x256xf32, #tpu.memory_space<vmem>>, %arg6: memref<32x1xf32, #tpu.memory_space<vmem>>, %arg7: memref<1x1x32xf32, #tpu.memory_space<vmem>>, %arg8: memref<32x1xf32, #tpu.memory_space<vmem>>, %arg9: memref<32x32xf32, #tpu.memory_space<vmem>>) attributes {dimension_semantics = [#tpu.dimension_semantics<arbitrary>, #tpu.dimension_semantics<arbitrary>], iteration_bounds = array<i64: 1, 1>, scalar_prefetch = 2 : i64, scratch_operands = 1 : i64, tpu.core_type = #tpu.core_type<tc>, window_params = [{transform_indices = @transform_0, window_bounds = array<i64: 32, 256>}, {transform_indices = @transform_1, window_bounds = array<i64: 32, 256>}, {transform_indices = @transform_2, window_bounds = array<i64: 32, 1>}, {transform_indices = @transform_3, window_bounds = array<i64: 1, 1, 32>}, {transform_indices = @transform_4, window_bounds = array<i64: 32, 1>}]} {
    %0 = arith.index_cast %arg0 : i32 to index
    %1 = memref.load %arg2[%0] : memref<1xi32, #tpu.memory_space<smem>>
    %2 = arith.index_cast %arg0 : i32 to index
    %3 = memref.load %arg3[%2] : memref<1xi32, #tpu.memory_space<smem>>
    %c0_i32 = arith.constant 0 : i32
    %4 = arith.cmpi eq, %arg1, %c0_i32 : i32
    %5 = arith.extui %4 : i1 to i32
    %c0_i32_0 = arith.constant 0 : i32
    %6 = arith.cmpi ne, %5, %c0_i32_0 : i32
    scf.if %6 {
      %cst_12 = arith.constant 0.000000e+00 : f32
      %21 = vector.broadcast %cst_12 : f32 to vector<32x32xf32>
      %c0_13 = arith.constant 0 : index
      %c0_14 = arith.constant 0 : index
      %22 = vector.load %arg9[%c0_13, %c0_14] : memref<32x32xf32, #tpu.memory_space<vmem>>, vector<32x32xf32>
      tpu.vector_store %arg9[%c0_13, %c0_14], %21 {strides = array<i32>} : memref<32x32xf32, #tpu.memory_space<vmem>>, vector<32x32xf32>,
    } else {
    }
    %7 = arith.cmpi eq, %1, %3 : i32
    %c0_i32_1 = arith.constant 0 : i32
    %8 = arith.cmpi eq, %arg1, %c0_i32_1 : i32
    %9 = arith.andi %7, %8 : i1
    %10 = arith.extui %9 : i1 to i32
    %c0_i32_2 = arith.constant 0 : i32
    %11 = arith.cmpi ne, %10, %c0_i32_2 : i32
    scf.if %11 {
      %cst_12 = arith.constant 0.000000e+00 : f32
      %21 = vector.broadcast %cst_12 : f32 to vector<32x1xf32>
      %c0_13 = arith.constant 0 : index
      %c0_14 = arith.constant 0 : index
      %22 = vector.load %arg8[%c0_13, %c0_14] : memref<32x1xf32, #tpu.memory_space<vmem>>, vector<32x1xf32>
      tpu.vector_store %arg8[%c0_13, %c0_14], %21 {strides = array<i32>} : memref<32x1xf32, #tpu.memory_space<vmem>>, vector<32x1xf32>,
    } else {
    }
    %c0 = arith.constant 0 : index
    %c0_3 = arith.constant 0 : index
    %12 = vector.load %arg9[%c0, %c0_3] : memref<32x32xf32, #tpu.memory_space<vmem>>, vector<32x32xf32>
    %c0_4 = arith.constant 0 : index
    %c0_5 = arith.constant 0 : index
    %13 = vector.load %arg4[%c0_4, %c0_5] : memref<32x256xf32, #tpu.memory_space<vmem>>, vector<32x256xf32>
    %c0_6 = arith.constant 0 : index
    %c0_7 = arith.constant 0 : index
    %14 = vector.load %arg5[%c0_6, %c0_7] : memref<32x256xf32, #tpu.memory_space<vmem>>, vector<32x256xf32>
    %cst = arith.constant dense<0.000000e+00> : vector<32x32xf32>
    %15 = tpu.matmul %13, %14, %cst {dimension_numbers = #tpu.dot_dimension_numbers<[1], [1], [0], [0], [0, 0, 1, 0], [], []>} : vector<32x256xf32>, vector<32x256xf32>, vector<32x32xf32> -> vector<32x32xf32>
    %16 = arith.addf %12, %15 : vector<32x32xf32>
    %c0_8 = arith.constant 0 : index
    %c0_9 = arith.constant 0 : index
    %17 = vector.load %arg9[%c0_8, %c0_9] : memref<32x32xf32, #tpu.memory_space<vmem>>, vector<32x32xf32>
    tpu.vector_store %arg9[%c0_8, %c0_9], %16 {strides = array<i32>} : memref<32x32xf32, #tpu.memory_space<vmem>>, vector<32x32xf32>,
    %c0_i32_10 = arith.constant 0 : i32
    %18 = arith.cmpi eq, %arg1, %c0_i32_10 : i32
    %19 = arith.extui %18 : i1 to i32
    %c0_i32_11 = arith.constant 0 : i32
    %20 = arith.cmpi ne, %19, %c0_i32_11 : i32
    scf.if %20 {
      %c0_12 = arith.constant 0 : index
      %c0_13 = arith.constant 0 : index
      %21 = vector.load %arg6[%c0_12, %c0_13] : memref<32x1xf32, #tpu.memory_space<vmem>>, vector<32x1xf32>
      %c0_14 = arith.constant 0 : index
      %c0_15 = arith.constant 0 : index
      %c0_16 = arith.constant 0 : index
      %22 = vector.load %arg7[%c0_14, %c0_15, %c0_16] : memref<1x1x32xf32, #tpu.memory_space<vmem>>, vector<1x1x32xf32>
      %23 = vector.shape_cast %22 : vector<1x1x32xf32> to vector<1x32xf32>
      %c0_17 = arith.constant 0 : index
      %c0_18 = arith.constant 0 : index
      %24 = vector.load %arg9[%c0_17, %c0_18] : memref<32x32xf32, #tpu.memory_space<vmem>>, vector<32x32xf32>
      %25 = vector.broadcast %21 : vector<32x1xf32> to vector<32x32xf32>
      %26 = arith.mulf %24, %25 : vector<32x32xf32>
      %27 = vector.broadcast %23 : vector<1x32xf32> to vector<32x32xf32>
      %28 = arith.mulf %26, %27 : vector<32x32xf32>
      %cst_19 = arith.constant 5.000000e-04 : f32
      %cst_20 = arith.constant 0.999499976 : f32
      %29 = vector.broadcast %cst_19 : f32 to vector<32x32xf32>
      %30 = arith.maximumf %29, %28 : vector<32x32xf32>
      %31 = vector.broadcast %cst_20 : f32 to vector<32x32xf32>
      %32 = arith.minimumf %31, %30 : vector<32x32xf32>
      %cst_21 = arith.constant 1.000000e+00 : f32
      %33 = vector.broadcast %cst_21 : f32 to vector<32x32xf32>
      %34 = arith.subf %33, %32 : vector<32x32xf32>
      %35 = math.log %34 : vector<32x32xf32>
      %cst_22 = arith.constant 0.000000e+00 : f32
      %36 = vector.broadcast %cst_22 : f32 to vector<32x32xf32>
      %37 = arith.subf %36, %35 : vector<32x32xf32>
      %38 = tpu.iota {dimensions = array<i32: 0>} : vector<32x32xi32>
      %c32_i32 = arith.constant 32 : i32
      %39 = arith.muli %1, %c32_i32 : i32
      %40 = vector.broadcast %39 : i32 to vector<32x32xi32>
      %41 = arith.addi %38, %40 : vector<32x32xi32>
      %42 = tpu.iota {dimensions = array<i32: 1>} : vector<32x32xi32>
      %c32_i32_23 = arith.constant 32 : i32
      %43 = arith.muli %3, %c32_i32_23 : i32
      %44 = vector.broadcast %43 : i32 to vector<32x32xi32>
      %45 = arith.addi %42, %44 : vector<32x32xi32>
      %c32_i32_24 = arith.constant 32 : i32
      %46 = vector.broadcast %c32_i32_24 : i32 to vector<32x32xi32>
      %47 = arith.cmpi slt, %41, %46 : vector<32x32xi32>
      %c32_i32_25 = arith.constant 32 : i32
      %48 = vector.broadcast %c32_i32_25 : i32 to vector<32x32xi32>
      %49 = arith.cmpi slt, %45, %48 : vector<32x32xi32>
      %50 = arith.andi %47, %49 : vector<32x32xi1>
      %51 = arith.cmpi ne, %41, %45 : vector<32x32xi32>
      %52 = arith.andi %50, %51 : vector<32x32xi1>
      %cst_26 = arith.constant 0.000000e+00 : f32
      %53 = vector.broadcast %cst_26 : f32 to vector<32x32xf32>
      %54 = arith.select %52, %37, %53 : vector<32x32xi1>, vector<32x32xf32>
      %55 = arith.cmpi eq, %1, %3 : i32
      %cst_27 = arith.constant 1.000000e+00 : f32
      %cst_28 = arith.constant 2.000000e+00 : f32
      %56 = arith.select %55, %cst_27, %cst_28 : f32
      %c0_29 = arith.constant 0 : index
      %c0_30 = arith.constant 0 : index
      %57 = vector.load %arg8[%c0_29, %c0_30] : memref<32x1xf32, #tpu.memory_space<vmem>>, vector<32x1xf32>
      %cst_31 = arith.constant dense<0.000000e+00> : vector<32xf32>
      %58 = vector.multi_reduction <add>, %54, %cst_31 [1] : vector<32x32xf32> to vector<32xf32>
      %59 = vector.shape_cast %58 : vector<32xf32> to vector<32x1xf32>
      %60 = vector.broadcast %56 : f32 to vector<32x1xf32>
      %61 = arith.mulf %60, %59 : vector<32x1xf32>
      %62 = arith.addf %57, %61 : vector<32x1xf32>
      %c0_32 = arith.constant 0 : index
      %c0_33 = arith.constant 0 : index
      %63 = vector.load %arg8[%c0_32, %c0_33] : memref<32x1xf32, #tpu.memory_space<vmem>>, vector<32x1xf32>
      tpu.vector_store %arg8[%c0_32, %c0_33], %62 {strides = array<i32>} : memref<32x1xf32, #tpu.memory_space<vmem>>, vector<32x1xf32>,
    } else {
    }
    return
  }
  func.func @transform_0(%arg0: i32, %arg1: i32, %arg2: memref<1xi32, #tpu.memory_space<smem>>, %arg3: memref<1xi32, #tpu.memory_space<smem>>) -> (i32, i32) {
    %0 = arith.index_cast %arg0 : i32 to index
    %1 = memref.load %arg2[%0] : memref<1xi32, #tpu.memory_space<smem>>
    %c0_i32 = arith.constant 0 : i32
    return %1, %arg1 : i32, i32
  }
  func.func @transform_1(%arg0: i32, %arg1: i32, %arg2: memref<1xi32, #tpu.memory_space<smem>>, %arg3: memref<1xi32, #tpu.memory_space<smem>>) -> (i32, i32) {
    %0 = arith.index_cast %arg0 : i32 to index
    %1 = memref.load %arg3[%0] : memref<1xi32, #tpu.memory_space<smem>>
    %c0_i32 = arith.constant 0 : i32
    return %1, %arg1 : i32, i32
  }
  func.func @transform_2(%arg0: i32, %arg1: i32, %arg2: memref<1xi32, #tpu.memory_space<smem>>, %arg3: memref<1xi32, #tpu.memory_space<smem>>) -> (i32, i32) {
    %0 = arith.index_cast %arg0 : i32 to index
    %1 = memref.load %arg2[%0] : memref<1xi32, #tpu.memory_space<smem>>
    %c0_i32 = arith.constant 0 : i32
    %c0_i32_0 = arith.constant 0 : i32
    return %1, %c0_i32 : i32, i32
  }
  func.func @transform_3(%arg0: i32, %arg1: i32, %arg2: memref<1xi32, #tpu.memory_space<smem>>, %arg3: memref<1xi32, #tpu.memory_space<smem>>) -> (i32, i32, i32) {
    %0 = arith.index_cast %arg0 : i32 to index
    %1 = memref.load %arg3[%0] : memref<1xi32, #tpu.memory_space<smem>>
    %c0_i32 = arith.constant 0 : i32
    %c0_i32_0 = arith.constant 0 : i32
    %c0_i32_1 = arith.constant 0 : i32
    return %1, %c0_i32, %c0_i32_0 : i32, i32, i32
  }
  func.func @transform_4(%arg0: i32, %arg1: i32, %arg2: memref<1xi32, #tpu.memory_space<smem>>, %arg3: memref<1xi32, #tpu.memory_space<smem>>) -> (i32, i32) {
    %0 = arith.index_cast %arg0 : i32 to index
    %1 = memref.load %arg2[%0] : memref<1xi32, #tpu.memory_space<smem>>
    %c0_i32 = arith.constant 0 : i32
    %c0_i32_0 = arith.constant 0 : i32
    return %1, %c0_i32 : i32, i32
  }
}

</mosaic_0001>

<llo_original>
// kernel: tpu_custom_call.1
$region0: #{tpu_custom_call.1}
  #allocation0 [shape = 'u32[]', space=smem, size = 0x4, offset = 0x4, fixed_abs, tag = 'smem constant byte address 0x4 - core index']
  #allocation1 [shape = 'u32[144,128]{1,0:T(1,128)}', space=vmem, size = 0x12000, scoped, tag = 'internal scratch']
  #allocation2 [shape = 'f32[32,32]{1,0:T(8,128)}', space=vmem, size = 0x4000, scoped, tag = 'scratch operand']
  #allocation3 [shape = 's32[1]{0}', space=sflag, size = 0x4, scoped, tag = 'scoped memory for tpu_custom_call.1']
  #allocation4 [shape = 's32[1]{0:T(128)S(6)}', space=smem, size = 0x200, scoped, tag = 'prefetched SMEM operand 0']
  #allocation5 [shape = 's32[1]{0:T(128)S(6)}', space=smem, size = 0x200, scoped, tag = 'prefetched SMEM operand 1']
  %s0 = inlined_call_operand.<no memory space> [shape: s32[1], index: 0, kind: input, shape index: {}]
  %s1 = inlined_call_operand.<no memory space> [shape: s32[1], index: 1, kind: input, shape index: {}]
  %s2 = inlined_call_operand.hbm [shape: f32[32,256], index: 2, kind: input, shape index: {}]
  %s3 = inlined_call_operand.hbm [shape: f32[32,256], index: 3, kind: input, shape index: {}]
  %s4 = inlined_call_operand.vmem [shape: f32[32,1], index: 4, kind: input, shape index: {}]
  %s5 = inlined_call_operand.vmem [shape: f32[1,1,32], index: 5, kind: input, shape index: {}]
  %s6 = inlined_call_operand.vmem [shape: f32[32,1], index: 6, kind: output, shape index: {}]
  %s7 = sld [smem:[#allocation0]]
  $region46: #{tpu_custom_call.1} parent=0
    _
  %s9 = ssub.s32 1, %s7
  %s10 = scalar_select 0, %s9, %s7
  %11 = sst [smem:[#allocation4]] %s0
  %12 = sst [smem:[#allocation5]] %s1
  $region1: #{tpu_custom_call.1} parent=0
    #allocation6 [shape = 'u8[32768]{0}', space=vmem, size = 0x8000, scoped, tag = 'input window, operand 2, single buffered']
    #allocation7 [shape = 's32[1]{0}', space=sflag, size = 0x4, scoped, tag = 'scoped memory for tpu_custom_call.1']
    #allocation8 [shape = 'u8[32768]{0}', space=vmem, size = 0x8000, scoped, tag = 'input window, operand 3, single buffered']
    #allocation9 [shape = 's32[1]{0}', space=sflag, size = 0x4, scoped, tag = 'scoped memory for tpu_custom_call.1']
    %13 = vsyncpa [#allocation7], 0
    %14 = vsyncpa [#allocation9], 0
    // Predicated region
    $region2: #{tpu_custom_call.1} parent=1 // pred_check
      _
    $region3: #{tpu_custom_call.1} parent=1 // pred_check_branch
      %16 = sbr.rel (0) target = $region5
    $region4: #{tpu_custom_call.1} parent=1 // pred_region
      %s17 = sld [smem:[#allocation4]]
      %s18 = smul.u32 4, %s17
      %s20 = ssub.s32 1024, 1024
      %21 = vsyncadd [#allocation7], %s20
      %s22 = smul.addr %s18, 2
      %s23 = smul.addr %s22, 128
      %s24 = scalar_lea.hbm %s2, %s23
      %s25 = sshll.u32 [#allocation6], 4
      %s26 = int_to_ptr.vmem [resolvable:$true] %s25
      %31 = dma.hbm_to_vmem [thread:$0]  %s24, 1024, %s26, [#allocation7], 256, 256, 16
    $region5: #{tpu_custom_call.1} parent=1 // pred_fallthru
      _
    // Predicated region
    $region6: #{tpu_custom_call.1} parent=1 // pred_check
      _
    $region7: #{tpu_custom_call.1} parent=1 // pred_check_branch
      %33 = sbr.rel (0) target = $region9
    $region8: #{tpu_custom_call.1} parent=1 // pred_region
      %s34 = sld [smem:[#allocation5]]
      %s35 = smul.u32 4, %s34
      %s37 = ssub.s32 1024, 1024
      %38 = vsyncadd [#allocation9], %s37
      %s39 = smul.addr %s35, 2
      %s40 = smul.addr %s39, 128
      %s41 = scalar_lea.hbm %s3, %s40
      %s42 = sshll.u32 [#allocation8], 4
      %s43 = int_to_ptr.vmem [resolvable:$true] %s42
      %48 = dma.hbm_to_vmem [thread:$0]  %s41, 1024, %s43, [#allocation9], 256, 256, 16
    $region9: #{tpu_custom_call.1} parent=1 // pred_fallthru
      _
    // Predicated region
    $region10: #{tpu_custom_call.1} parent=1 // pred_check
      _
    $region11: #{tpu_custom_call.1} parent=1 // pred_check_branch
      %50 = sbr.rel (0) target = $region13
    $region12: #{tpu_custom_call.1} parent=1 // pred_region
      %s51 = sld [smem:[#allocation4]]
      %s52 = smul.u32 4, %s51
      %p53 = scmp.lt.s32.totalorder %s52, 3
      %s54 = scalar_select %p53, %s52, 3
      %s55 = smul.addr %s54, 8
      %s56 = scalar_lea.vmem %s4, %s55
      %s57 = sld [smem:[#allocation4]]
      %s58 = smul.u32 4, %s57
    $region13: #{tpu_custom_call.1} parent=1 // pred_fallthru
      _
    // Predicated region
    $region14: #{tpu_custom_call.1} parent=1 // pred_check
      _
    $region15: #{tpu_custom_call.1} parent=1 // pred_check_branch
      %60 = sbr.rel (0) target = $region17
    $region16: #{tpu_custom_call.1} parent=1 // pred_region
      %s61 = sld [smem:[#allocation5]]
      %p62 = scmp.lt.s32.totalorder %s61, 0
      %s63 = scalar_select %p62, %s61, 0
      %s64 = scalar_lea.vmem %s5, %s63
      %s65 = sld [smem:[#allocation5]]
    $region17: #{tpu_custom_call.1} parent=1 // pred_fallthru
      _
    // Predicated region
    $region18: #{tpu_custom_call.1} parent=1 // pred_check
      _
    $region19: #{tpu_custom_call.1} parent=1 // pred_check_branch
      %67 = sbr.rel (0) target = $region21
    $region20: #{tpu_custom_call.1} parent=1 // pred_region
      %68 = dma.done [#allocation7], 1024
    $region21: #{tpu_custom_call.1} parent=1 // pred_fallthru
      _
    // Predicated region
    $region22: #{tpu_custom_call.1} parent=1 // pred_check
      _
    $region23: #{tpu_custom_call.1} parent=1 // pred_check_branch
      %70 = sbr.rel (0) target = $region25
    $region24: #{tpu_custom_call.1} parent=1 // pred_region
      %71 = dma.done [#allocation9], 1024
    $region25: #{tpu_custom_call.1} parent=1 // pred_fallthru
      _
    %s72 = sld [smem:[#allocation4]]
    %s73 = smul.u32 4, %s72
    %p74 = scmp.lt.s32.totalorder %s73, 3
    %s75 = scalar_select %p74, %s73, 3
    %s76 = smul.addr %s75, 8
    %s77 = scalar_lea.vmem %s4, %s76
    %s78 = sld [smem:[#allocation5]]
    %p79 = scmp.lt.s32.totalorder %s78, 0
    %s80 = scalar_select %p79, %s78, 0
    %s81 = scalar_lea.vmem %s5, %s80
    %s82 = sld [smem:[#allocation4]]
    %s83 = smul.u32 4, %s82
    %p84 = scmp.lt.s32.totalorder %s83, 3
    %s85 = scalar_select %p84, %s83, 3
    %s86 = smul.addr %s85, 8
    %s87 = scalar_lea.vmem %s6, %s86
    %s88 = sld [smem:[#allocation4]]
    %s89 = smul.u32 4, %s88
    %s90 = sld [smem:[#allocation5]]
    %s91 = smul.u32 4, %s90
    %s92 = sld [smem:[#allocation4]]
    %s93 = smul.u32 4, %s92
    %p94 = scmp.lt.s32.totalorder %s93, 3
    %s95 = scalar_select %p94, %s93, 3
    %s96 = smul.addr %s95, 8
    %s97 = scalar_lea.vmem %s4, %s96
    %s98 = sld [smem:[#allocation4]]
    %s99 = smul.u32 4, %s98
    %s100 = sld [smem:[#allocation5]]
    %p101 = scmp.lt.s32.totalorder %s100, 0
    %s102 = scalar_select %p101, %s100, 0
    %s103 = scalar_lea.vmem %s5, %s102
    %s104 = sld [smem:[#allocation5]]
    %s105 = sld [smem:[#allocation4]]
    %s106 = smul.u32 4, %s105
    %p107 = scmp.lt.s32.totalorder %s106, 3
    %s108 = scalar_select %p107, %s106, 3
    %s109 = smul.addr %s108, 8
    %s110 = scalar_lea.vmem %s6, %s109
    %s111 = sld [smem:[#allocation4]]
    %s112 = smul.u32 4, %s111
    %s113 = sld [smem:[#allocation4]]
    %s114 = sld [smem:[#allocation5]]
    %p115 = scmp.eq.s32.totalorder 0, 0
    // Predicated region
    $region26: #{tpu_custom_call.1} parent=1 // pred_check
      %p116 = pneg %p115
    $region27: #{tpu_custom_call.1} parent=1 // pred_check_branch
      %118 = sbr.rel (%p116) target = $region29
    $region28: #{tpu_custom_call.1} parent=1 // pred_region
      %vm119 = vcmask 261120
      %120 = vst.msk [vmem:[#allocation2] sm:$0xff] %vm119, 0.0
      %121 = vst.msk [vmem:[#allocation2 + $0x8] sm:$0xff] %vm119, 0.0
      %122 = vst.msk [vmem:[#allocation2 + $0x10] sm:$0xff] %vm119, 0.0
      %123 = vst.msk [vmem:[#allocation2 + $0x18] sm:$0xff] %vm119, 0.0
    $region29: #{tpu_custom_call.1} parent=1 // pred_fallthru
      _
    %p124 = scmp.eq.s32.totalorder %s113, %s114
    %p125 = pnand %p124, %p115
    %p126 = pneg %p125
    // Predicated region
    $region30: #{tpu_custom_call.1} parent=1 // pred_check
      _
    $region31: #{tpu_custom_call.1} parent=1 // pred_check_branch
      %128 = sbr.rel (%p125) target = $region33
    $region32: #{tpu_custom_call.1} parent=1 // pred_region
      %vm129 = vcmask 7168
      %130 = vst.msk [vmem:[%s110] sm:$0xff] %vm129, 0.0
      %131 = vst.msk [vmem:[%s110 + $0x8] sm:$0xff] %vm129, 0.0
      %132 = vst.msk [vmem:[%s110 + $0x10] sm:$0xff] %vm129, 0.0
      %133 = vst.msk [vmem:[%s110 + $0x18] sm:$0xff] %vm129, 0.0
    $region33: #{tpu_custom_call.1} parent=1 // pred_fallthru
      _
    %v134 = vld [vmem:[#allocation2] sm:$0xff]
    %v135 = vld [vmem:[#allocation2 + $0x8] sm:$0xff]
    %v136 = vld [vmem:[#allocation2 + $0x10] sm:$0xff]
    %v137 = vld [vmem:[#allocation2 + $0x18] sm:$0xff]
    %v138 = vld [vmem:[#allocation6] sm:$0xff]
    %v139 = vld [vmem:[#allocation6 + $0x8] sm:$0xff]
    %v140 = vld [vmem:[#allocation6 + $0x10] sm:$0xff]
    %v141 = vld [vmem:[#allocation6 + $0x18] sm:$0xff]
    %v142 = vld [vmem:[#allocation6 + $0x20] sm:$0xff]
    %v143 = vld [vmem:[#allocation6 + $0x28] sm:$0xff]
    %v144 = vld [vmem:[#allocation6 + $0x30] sm:$0xff]
    %v145 = vld [vmem:[#allocation6 + $0x38] sm:$0xff]
    %v146 = vld [vmem:[#allocation8] sm:$0xff]
    %v147 = vld [vmem:[#allocation8 + $0x8] sm:$0xff]
    %v148 = vld [vmem:[#allocation8 + $0x10] sm:$0xff]
    %v149 = vld [vmem:[#allocation8 + $0x18] sm:$0xff]
    %v150 = vld [vmem:[#allocation8 + $0x20] sm:$0xff]
    %v151 = vld [vmem:[#allocation8 + $0x28] sm:$0xff]
    %v152 = vld [vmem:[#allocation8 + $0x30] sm:$0xff]
    %v153 = vld [vmem:[#allocation8 + $0x38] sm:$0xff]
    %154 = vmatprep.subr.mxu0 0.0
    %155 = vmatpush1.xpose.msra.mxu0 0.0
    %156 = vmatprep.subr.mxu0 0.0
    %157 = vmatpush1.xpose.msra.mxu0 0.0
    %158 = vmatprep.subr.mxu0 0.0
    %159 = vmatpush1.xpose.msra.mxu0 0.0
    %160 = vmatprep.subr.mxu0 0.0
    %161 = vmatpush1.xpose.msra.mxu0 0.0
    %162 = vmatprep.subr.mxu0 0.0
    %163 = vmatpush1.xpose.msra.mxu0 0.0
    %164 = vmatprep.subr.mxu0 0.0
    %165 = vmatpush1.xpose.msra.mxu0 0.0
    %166 = vmatprep.subr.mxu0 0.0
    %167 = vmatpush1.xpose.msra.mxu0 0.0
    %168 = vmatprep.subr.mxu0 0.0
    %169 = vmatpush1.xpose.msra.mxu0 0.0
    %170 = vmatprep.subr.mxu0 0.0
    %171 = vmatpush1.xpose.msra.mxu0 0.0
    %172 = vmatprep.subr.mxu0 0.0
    %173 = vmatpush1.xpose.msra.mxu0 0.0
    %174 = vmatprep.subr.mxu0 0.0
    %175 = vmatpush1.xpose.msra.mxu0 0.0
    %176 = vmatprep.subr.mxu0 0.0
    %177 = vmatpush1.xpose.msra.mxu0 0.0
    %178 = vmatprep.subr.mxu0 %v153
    %179 = vmatpush1.xpose.msra.mxu0 %v152
    %180 = vmatprep.subr.mxu0 %v151
    %181 = vmatpush1.xpose.msra.mxu0 %v150
    %182 = vmatprep.subr.mxu0 %v149
    %183 = vmatpush1.xpose.msra.mxu0 %v148
    %184 = vmatprep.subr.mxu0 %v147
    %185 = vmatpush1.xpose.msra.mxu0 %v146
    %186 = vmatprep.subr.mxu0 0.0
    %187 = vmatpush2.xpose.msra.mxu0 0.0
    %188 = vmatprep.subr.mxu0 0.0
    %189 = vmatpush2.xpose.msra.mxu0 0.0
    %190 = vmatprep.subr.mxu0 0.0
    %191 = vmatpush2.xpose.msra.mxu0 0.0
    %192 = vmatprep.subr.mxu0 0.0
    %193 = vmatpush2.xpose.msra.mxu0 0.0
    %194 = vmatprep.subr.mxu0 0.0
    %195 = vmatpush2.xpose.msra.mxu0 0.0
    %196 = vmatprep.subr.mxu0 0.0
    %197 = vmatpush2.xpose.msra.mxu0 0.0
    %198 = vmatprep.subr.mxu0 0.0
    %199 = vmatpush2.xpose.msra.mxu0 0.0
    %200 = vmatprep.subr.mxu0 0.0
    %201 = vmatpush2.xpose.msra.mxu0 0.0
    %202 = vmatprep.subr.mxu0 0.0
    %203 = vmatpush2.xpose.msra.mxu0 0.0
    %204 = vmatprep.subr.mxu0 0.0
    %205 = vmatpush2.xpose.msra.mxu0 0.0
    %206 = vmatprep.subr.mxu0 0.0
    %207 = vmatpush2.xpose.msra.mxu0 0.0
    %208 = vmatprep.subr.mxu0 0.0
    %209 = vmatpush2.xpose.msra.mxu0 0.0
    %210 = vmatprep.subr.mxu0 0.0
    %211 = vmatpush2.xpose.msra.mxu0 0.0
    %212 = vmatprep.subr.mxu0 0.0
    %213 = vmatpush2.xpose.msra.mxu0 0.0
    %214 = vmatprep.subr.mxu0 0.0
    %215 = vmatpush2.xpose.msra.mxu0 0.0
    %216 = vmatprep.subr.mxu0 0.0
    %217 = vmatpush2.xpose.msra.mxu0 0.0
    %218 = vmatprep.mubr.f32.mxu0 %v139
    %219 = vmatmul.mubr.f32.gmra.mxu0 %v138
    %v220 = vpop.f32.mrf.mxu0
    %v221 = vadd.f32 0.0, %v220
    %v222 = vpop.f32.mrf.mxu0
    %223 = vmatprep.mubr.f32.mxu0 %v141
    %224 = vmatmul.mubr.f32.gmra.mxu0 %v140
    %v225 = vpop.f32.mrf.mxu0
    %v226 = vadd.f32 0.0, %v225
    %v227 = vpop.f32.mrf.mxu0
    %228 = vmatprep.mubr.f32.mxu0 %v143
    %229 = vmatmul.mubr.f32.gmra.mxu0 %v142
    %v230 = vpop.f32.mrf.mxu0
    %v231 = vadd.f32 0.0, %v230
    %v232 = vpop.f32.mrf.mxu0
    %233 = vmatprep.mubr.f32.mxu0 %v145
    %234 = vmatmul.mubr.f32.gmra.mxu0 %v144
    %v235 = vpop.f32.mrf.mxu0
    %v236 = vadd.f32 0.0, %v235
    %v237 = vpop.f32.mrf.mxu0
    %238 = vdwg.mxu0
    %v239 = vadd.f32 %v134, %v221
    %v240 = vadd.f32 %v135, %v226
    %v241 = vadd.f32 %v136, %v231
    %v242 = vadd.f32 %v137, %v236
    %vm243 = vcmask 261120
    %244 = vst.msk [vmem:[#allocation2] sm:$0xff] %vm243, %v239
    %245 = vst.msk [vmem:[#allocation2 + $0x8] sm:$0xff] %vm243, %v240
    %246 = vst.msk [vmem:[#allocation2 + $0x10] sm:$0xff] %vm243, %v241
    %247 = vst.msk [vmem:[#allocation2 + $0x18] sm:$0xff] %vm243, %v242
    // Predicated region
    $region34: #{tpu_custom_call.1} parent=1 // pred_check
      %p248 = pneg %p115
    $region35: #{tpu_custom_call.1} parent=1 // pred_check_branch
      %250 = sbr.rel (%p248) target = $region37
    $region36: #{tpu_custom_call.1} parent=1 // pred_region
      %v251 = vld [vmem:[%s97] sm:$0xff]
      %v252 = vld [vmem:[%s97 + $0x8] sm:$0xff]
      %v253 = vld [vmem:[%s97 + $0x10] sm:$0xff]
      %v254 = vld [vmem:[%s97 + $0x18] sm:$0xff]
      %v255 = vld [vmem:[%s103] sm:$0x1]
      %v256 = vld [vmem:[#allocation2] sm:$0xff]
      %v257 = vld [vmem:[#allocation2 + $0x8] sm:$0xff]
      %v258 = vld [vmem:[#allocation2 + $0x10] sm:$0xff]
      %v259 = vld [vmem:[#allocation2 + $0x18] sm:$0xff]
      %261 = vset.pattern.permute.xlu0 0
      %262 = vperm.xlu0 %261, %v251
      %v263 = vpop.permute.xlu0 %262
      %266 = vset.pattern.permute.xlu0 0
      %267 = vperm.xlu0 %266, %v252
      %v268 = vpop.permute.xlu0 %267
      %271 = vset.pattern.permute.xlu0 0
      %272 = vperm.xlu0 %271, %v253
      %v273 = vpop.permute.xlu0 %272
      %276 = vset.pattern.permute.xlu0 0
      %277 = vperm.xlu0 %276, %v254
      %v278 = vpop.permute.xlu0 %277
      %v280 = vmul.f32 %v256, %v263
      %v281 = vmul.f32 %v257, %v268
      %v282 = vmul.f32 %v258, %v273
      %v283 = vmul.f32 %v259, %v278
      %v285 = vlaneseq
      %v286 = vshrl.u32 %v285, 7
      %v287 = vsub.s32 0, %v286
      %v288 = vrot.slane %v255, %v287
      %v290 = vmul.f32 %v280, %v288
      %v291 = vmul.f32 %v281, %v288
      %v292 = vmul.f32 %v282, %v288
      %v293 = vmul.f32 %v283, %v288
      %v294 = vmax.f32 %v290, 0.0005
      %v295 = vmax.f32 %v291, 0.0005
      %v296 = vmax.f32 %v292, 0.0005
      %v297 = vmax.f32 %v293, 0.0005
      %v298 = vmin.f32 %v294, 0.9995
      %v299 = vmin.f32 %v295, 0.9995
      %v300 = vmin.f32 %v296, 0.9995
      %v301 = vmin.f32 %v297, 0.9995
      %v302 = vsub.f32 1.0, %v298
      %v303 = vsub.f32 1.0, %v299
      %v304 = vsub.f32 1.0, %v300
      %v305 = vsub.f32 1.0, %v301
      %v306 = vlog2.pop %v302
      %v307 = vmul.f32 %v306, 0.6931472
      %v308 = vlog2.pop %v303
      %v309 = vmul.f32 %v308, 0.6931472
      %v310 = vlog2.pop %v304
      %v311 = vmul.f32 %v310, 0.6931472
      %v312 = vlog2.pop %v305
      %v313 = vmul.f32 %v312, 0.6931472
      %v314 = vsub.f32 0.0, %v307
      %v315 = vsub.f32 0.0, %v309
      %v316 = vsub.f32 0.0, %v311
      %v317 = vsub.f32 0.0, %v313
      %v318 = vlaneseq
      %v319 = vshrl.u32 %v318, 7
      %v320 = vadd.s32 %v319, 8
      %v321 = vadd.s32 %v319, 16
      %v322 = vadd.s32 %v319, 24
      %s323 = smul.u32 %s113, 32
      %v324 = vstv %s323
      %v325 = vadd.s32 %v319, %v324
      %v326 = vadd.s32 %v320, %v324
      %v327 = vadd.s32 %v321, %v324
      %v328 = vadd.s32 %v322, %v324
      %v329 = vlaneseq
      %v330 = vand.u32 %v329, 127
      %s331 = smul.u32 %s114, 32
      %v332 = vstv %s331
      %v333 = vadd.s32 %v330, %v332
      %vm334 = vcmp.lt.s32.totalorder %v325, 32
      %vm335 = vcmp.lt.s32.totalorder %v326, 32
      %vm336 = vcmp.lt.s32.totalorder %v327, 32
      %vm337 = vcmp.lt.s32.totalorder %v328, 32
      %vm338 = vcmp.lt.s32.totalorder %v333, 32
      %vm339 = vmand %vm334, %vm338
      %vm340 = vmand %vm335, %vm338
      %vm341 = vmand %vm336, %vm338
      %vm342 = vmand %vm337, %vm338
      %vm343 = vcmp.ne.s32.totalorder %v325, %v333
      %vm344 = vcmp.ne.s32.totalorder %v326, %v333
      %vm345 = vcmp.ne.s32.totalorder %v327, %v333
      %vm346 = vcmp.ne.s32.totalorder %v328, %v333
      %vm347 = vmand %vm339, %vm343
      %vm348 = vmand %vm340, %vm344
      %vm349 = vmand %vm341, %vm345
      %vm350 = vmand %vm342, %vm346
      %v351 = vsel %vm347, %v314, 0.0
      %v352 = vsel %vm348, %v315, 0.0
      %v353 = vsel %vm349, %v316, 0.0
      %v354 = vsel %vm350, %v317, 0.0
      %s355 = scalar_select %p124, 1.0, 2.0
      %v356 = vld [vmem:[%s110] sm:$0xff]
      %v357 = vld [vmem:[%s110 + $0x8] sm:$0xff]
      %v358 = vld [vmem:[%s110 + $0x10] sm:$0xff]
      %v359 = vld [vmem:[%s110 + $0x18] sm:$0xff]
      %v360 = vsel %vm243, %v351, 0.0
      %361 = vadd.xlane.f32.xlu0 %v360
      %v362 = vpop.xlane.xlu0 %361
      %v363 = vsel %vm243, %v352, 0.0
      %364 = vadd.xlane.f32.xlu0 %v363
      %v365 = vpop.xlane.xlu0 %364
      %v366 = vsel %vm243, %v353, 0.0
      %367 = vadd.xlane.f32.xlu0 %v366
      %v368 = vpop.xlane.xlu0 %367
      %v369 = vsel %vm243, %v354, 0.0
      %370 = vadd.xlane.f32.xlu0 %v369
      %v371 = vpop.xlane.xlu0 %370
      %v372 = vstv %s355
      %v373 = vmul.f32 %v372, %v362
      %v374 = vmul.f32 %v372, %v365
      %v375 = vmul.f32 %v372, %v368
      %v376 = vmul.f32 %v372, %v371
      %v377 = vadd.f32 %v356, %v373
      %v378 = vadd.f32 %v357, %v374
      %v379 = vadd.f32 %v358, %v375
      %v380 = vadd.f32 %v359, %v376
      %vm381 = vcmask 7168
      %382 = vst.msk [vmem:[%s110] sm:$0xff] %vm381, %v377
      %383 = vst.msk [vmem:[%s110 + $0x8] sm:$0xff] %vm381, %v378
      %384 = vst.msk [vmem:[%s110 + $0x10] sm:$0xff] %vm381, %v379
      %385 = vst.msk [vmem:[%s110 + $0x18] sm:$0xff] %vm381, %v380
    $region37: #{tpu_custom_call.1} parent=1 // pred_fallthru
      _
    %s386 = sld [smem:[#allocation4]]
    %s387 = smul.u32 4, %s386
    %p388 = scmp.lt.s32.totalorder %s387, 3
    %s389 = scalar_select %p388, %s387, 3
    %s390 = smul.addr %s389, 8
    %s391 = scalar_lea.vmem %s6, %s390
    // Predicated region
    $region38: #{tpu_custom_call.1} parent=1 // pred_check
      _
    $region39: #{tpu_custom_call.1} parent=1 // pred_check_branch
      %393 = sbr.rel (0) target = $region41
    $region40: #{tpu_custom_call.1} parent=1 // pred_region
      %s394 = sld [smem:[#allocation4]]
      %s395 = smul.u32 4, %s394
    $region41: #{tpu_custom_call.1} parent=1 // pred_fallthru
      _
    // Predicated region
    $region42: #{tpu_custom_call.1} parent=1 // pred_check
      _
    $region43: #{tpu_custom_call.1} parent=1 // pred_check_branch
      %397 = sbr.rel (0) target = $region45
    $region44: #{tpu_custom_call.1} parent=1 // pred_region
      %s398 = sld [smem:[#allocation4]]
      %s399 = smul.u32 4, %s398
      %p400 = scmp.lt.s32.totalorder %s399, 3
      %s401 = scalar_select %p400, %s399, 3
      %s402 = smul.addr %s401, 8
      %s403 = scalar_lea.vmem %s6, %s402
    $region45: #{tpu_custom_call.1} parent=1 // pred_fallthru
      _
    %404 = vsyncpa [#allocation7], 1
    %405 = vsyncpa [#allocation9], 1

</llo_original>
